<compile_context>
chip_gen: v7x
topology: tpu7x:2x2x1
jax: 0.10.0
libtpu: 0.0.40
codegen_flags: <defaults>
</compile_context>

<pallas_src>
import functools

import jax
import jax.numpy as jnp
from jax import lax
from jax.experimental import pallas as pl
from jax.experimental.pallas import tpu as pltpu

_EPS = 1e-8          # torch.nn.functional.cosine_similarity default eps
_LANE_TILE = 1024    # batch (lane-axis) tile; multiple of 128
_OUT_LANES = 128


def _cdiv(a, b):
    return -(-a // b)


def _round_up(a, b):
    return _cdiv(a, b) * b


def _num_tensorcores_per_chip():
    # v7x has 2 TensorCores per chip; v5e/v6e have 1.
    try:
        kind = jax.devices()[0].device_kind.lower()
    except Exception:
        return 1
    return 2 if ("v7" in kind or "tpu7" in kind or "7x" in kind) else 1


def _mtp_loss_kernel(cls_ref, traj_ref, gt_ref, out_ref,
                     *, M, P, D, B, TB, need_mask):
    """One batch tile.  Batch on lanes, coordinate-major trajectories.

    cls_ref  : [M, TB]        mode logits (f32)
    traj_ref : [M, D, P, TB]  predicted trajectories (coord-major, bf16/f32)
    gt_ref   : [D, P, TB]     ground-truth trajectory (coord-major, bf16/f32)
    out_ref  : [1, 8, 128]    partial losses: row 0, lane 0 = cls, lanes 1..D = reg
    """
    # valid-lane mask for zero-padded batch columns (statically skipped if unpadded)
    if need_mask:
        lane = lax.broadcasted_iota(jnp.int32, (1, TB), 1)
        validf = ((pl.program_id(0) * TB + lane) < B).astype(jnp.float32)   # [1, TB]
    else:
        validf = None

    # ---- 1) distance = 1 - cos(pred_end[m], gt_end); endpoints read in-kernel ----
    dot = jnp.zeros((M, TB), jnp.float32)
    na2 = jnp.zeros((M, TB), jnp.float32)
    nb2 = jnp.zeros((1, TB), jnp.float32)
    for d in range(D):
        pe = traj_ref[:, d, P - 1, :].astype(jnp.float32)        # [M, TB]
        ge = gt_ref[d, P - 1:P, :].astype(jnp.float32)           # [1, TB]
        dot = dot + pe * ge
        na2 = na2 + pe * pe
        nb2 = nb2 + ge * ge
    # torch semantics: cos = dot / max(||a||*||b||, eps)  (product-of-norms clamp)
    inv = lax.rsqrt(jnp.maximum(na2 * nb2, _EPS * _EPS))          # EUP slot
    dist = 1.0 - dot * inv                                        # [M, TB]

    # ---- 2) first-occurrence argmin over modes (sublane axis) as one-hot ----
    min_dist = jnp.min(dist, axis=0, keepdims=True)               # [1, TB]
    mode_iota = lax.broadcasted_iota(jnp.int32, (M, TB), 0)       # [M, TB]
    idx = jnp.min(jnp.where(dist <= min_dist, mode_iota, M),
                  axis=0, keepdims=True)                          # [1, TB]
    one_hot = (mode_iota == idx).astype(jnp.float32)              # [M, TB]

    # ---- 3) classification loss: CE(pred_cls, argmin mode), mean over full B ----
    cls_logits = cls_ref[...].astype(jnp.float32)                 # [M, TB]
    mx = jnp.max(cls_logits, axis=0, keepdims=True)
    lse = mx + jnp.log(jnp.sum(jnp.exp(cls_logits - mx), axis=0, keepdims=True))
    sel_logit = jnp.sum(cls_logits * one_hot, axis=0, keepdims=True)
    ce = lse - sel_logit                                          # [1, TB]
    if validf is not None:
        ce = ce * validf
    cls_part = jnp.sum(ce, keepdims=True) * (1.0 / float(B))      # [1, 1]

    # ---- 4) per-coordinate mode selection + SmoothL1 (looped: low vreg pressure) ----
    reg_parts = []
    for d in range(D):
        gt_d = gt_ref[d].astype(jnp.float32)                      # [P, TB]
        sel = one_hot[0:1, :] * traj_ref[0, d].astype(jnp.float32)
        for m in range(1, M):                                     # accumulate best mode
            sel = sel + one_hot[m:m + 1, :] * traj_ref[m, d].astype(jnp.float32)
        diff = sel - gt_d
        ad = jnp.abs(diff)
        sl1 = jnp.where(ad < 1.0, 0.5 * diff * diff, ad - 0.5)    # SmoothL1, beta=1
        row = jnp.sum(sl1, axis=0, keepdims=True)                 # [1, TB] (sublane reduce)
        if validf is not None:
            row = row * validf
        reg_parts.append(jnp.sum(row, keepdims=True) * (1.0 / float(B * P)))  # [1, 1]

    # ---- 5) single lane-dense store of this tile's partial losses ----
    lanes = lax.broadcasted_iota(jnp.int32, (8, _OUT_LANES), 1)
    slab = jnp.where(lanes == 0, cls_part,
                     jnp.zeros((8, _OUT_LANES), jnp.float32))
    for d in range(D):
        slab = jnp.where(lanes == d + 1, reg_parts[d], slab)
    out_ref[...] = slab[None, :, :]


def mtp_loss(pred_cls, pred_trajectory, trajectory_label, *, num_cls, num_pts,
             dim=3, input_dtype=jnp.bfloat16):
    """MultipleTrajectoryPredictionLoss (distance_type='angle') via Pallas TPU kernel.

    Returns (cls_loss: scalar f32, reg_loss: [dim] f32).
    `input_dtype` controls how the large trajectory tensors are shipped to the
    kernel (bf16 halves DMA/transposed-copy bytes; use jnp.float32 for exact
    f32 parity with the torch forward). All accumulation is f32.
    """
    B = pred_cls.shape[0]
    M, P, D = num_cls, num_pts, dim
    assert D + 1 <= _OUT_LANES

    # ---- batch (lane-axis) tiling; >= 2 tiles on multi-TensorCore chips ----
    ncores = _num_tensorcores_per_chip()
    if B <= 128:
        TB, num_tiles = B, 1
    else:
        tb = min(_LANE_TILE, _round_up(B, 128))
        if ncores > 1:
            tb = min(tb, _round_up(_cdiv(B, ncores), 128))
        TB = tb
        num_tiles = _cdiv(B, TB)
    Bp = num_tiles * TB
    need_mask = Bp != B

    # ---- wrapper layout plumbing (cast first so pad/transpose move fewer bytes) ----
    traj4 = pred_trajectory.reshape(B, M, P, D).astype(input_dtype)   # torch head layout
    label = trajectory_label.reshape(B, P, D).astype(input_dtype)
    cls2 = pred_cls.astype(jnp.float32)

    if need_mask:  # pad batch BEFORE transposes so XLA fuses pad+transpose
        pad = Bp - B
        traj4 = jnp.pad(traj4, ((0, pad), (0, 0), (0, 0), (0, 0)))
        label = jnp.pad(label, ((0, pad), (0, 0), (0, 0)))
        cls2 = jnp.pad(cls2, ((0, pad), (0, 0)))

    cls_t = cls2.T                                 # [M, Bp]
    traj_t = jnp.transpose(traj4, (1, 3, 2, 0))    # [M, D, P, Bp] coord-major
    gt_t = jnp.transpose(label, (2, 1, 0))         # [D, P, Bp]

    kernel = functools.partial(_mtp_loss_kernel, M=M, P=P, D=D, B=B, TB=TB,
                               need_mask=need_mask)

    in_bytes = (cls_t.size * cls_t.dtype.itemsize
                + traj_t.size * traj_t.dtype.itemsize
                + gt_t.size * gt_t.dtype.itemsize)
    cost = pl.CostEstimate(
        flops=int(Bp * (5 * M * D + 10 * M + 2 * M * D * P + 7 * D * P)),
        transcendentals=int(2 * Bp * M),
        bytes_accessed=int(in_bytes + num_tiles * 8 * _OUT_LANES * 4))

    partials = pl.pallas_call(
        kernel,
        out_shape=jax.ShapeDtypeStruct((num_tiles, 8, _OUT_LANES), jnp.float32),
        grid_spec=pltpu.PrefetchScalarGridSpec(
            num_scalar_prefetch=0,
            grid=(num_tiles,),
            in_specs=[
                pl.BlockSpec((M, TB), lambda i: (0, i)),
                pl.BlockSpec((M, D, P, TB), lambda i: (0, 0, 0, i)),
                pl.BlockSpec((D, P, TB), lambda i: (0, 0, i)),
            ],
            out_specs=pl.BlockSpec((1, 8, _OUT_LANES), lambda i: (i, 0, 0)),
        ),
        compiler_params=pltpu.CompilerParams(
            dimension_semantics=("parallel",)),
        cost_estimate=cost,
    )(cls_t, traj_t, gt_t)

    # tiny cross-tile reduction of the per-tile partial losses
    slab = jnp.sum(partials[:, 0, :], axis=0)      # [128]
    return slab[0], slab[1:1 + D]


if __name__ == "__main__":
    # Small shapes consistent with the Trainer's loss call:
    #   pred_cls [B, num_cls], pred_trajectory [B, num_cls*num_pts*3], label [B, num_pts, 3]
    B, num_cls, num_pts, D = 2, 4, 8, 3
    mtp_alpha = 1.0
    optimize_per_n_step = 1

    key = jax.random.PRNGKey(0)
    k1, k2, k3 = jax.random.split(key, 3)
    pred_cls = jax.random.normal(k1, (B, num_cls), jnp.float32)
    pred_trajectory = jax.random.normal(k2, (B, num_cls * num_pts * D), jnp.float32)
    trajectory_label = jax.random.normal(k3, (B, num_pts, D), jnp.float32)

    loss_fn = jax.jit(functools.partial(mtp_loss, num_cls=num_cls,
                                        num_pts=num_pts, dim=D))
    cls_loss, reg_loss = loss_fn(pred_cls, pred_trajectory, trajectory_label)

    # As in compute_train_loss / compute_val_loss (glue in plain JAX):
    total_loss = (cls_loss + mtp_alpha * reg_loss.mean()) / optimize_per_n_step

    jax.block_until_ready((cls_loss, reg_loss, total_loss))
    print("KERNEL_OK")
</pallas_src>

<mosaic_0001>
module attributes {stable_mosaic.version = 11 : i64} {
  func.func @_mtp_loss_kernel(%arg0: i32, %arg1: memref<4x2xf32, #tpu.memory_space<vmem>>, %arg2: memref<4x3x8x2xbf16, #tpu.memory_space<vmem>>, %arg3: memref<3x8x2xbf16, #tpu.memory_space<vmem>>, %arg4: memref<1x8x128xf32, #tpu.memory_space<vmem>>) attributes {dimension_semantics = [#tpu.dimension_semantics<parallel>], iteration_bounds = array<i64: 1>, scalar_prefetch = 0 : i64, scratch_operands = 0 : i64, tpu.core_type = #tpu.core_type<tc>, window_params = [{transform_indices = @transform_0, window_bounds = array<i64: 4, 2>}, {transform_indices = @transform_1, window_bounds = array<i64: 4, 3, 8, 2>}, {transform_indices = @transform_2, window_bounds = array<i64: 3, 8, 2>}, {transform_indices = @transform_3, window_bounds = array<i64: 1, 8, 128>}]} {
    %cst = arith.constant 0.000000e+00 : f32
    %0 = vector.broadcast %cst : f32 to vector<4x2xf32>
    %cst_0 = arith.constant 0.000000e+00 : f32
    %1 = vector.broadcast %cst_0 : f32 to vector<4x2xf32>
    %cst_1 = arith.constant 0.000000e+00 : f32
    %2 = vector.broadcast %cst_1 : f32 to vector<1x2xf32>
    %c0 = arith.constant 0 : index
    %c0_2 = arith.constant 0 : index
    %c7 = arith.constant 7 : index
    %c0_3 = arith.constant 0 : index
    %3 = vector.load %arg2[%c0, %c0_2, %c7, %c0_3] : memref<4x3x8x2xbf16, #tpu.memory_space<vmem>>, vector<4x1x1x2xbf16>
    %4 = vector.shape_cast %3 : vector<4x1x1x2xbf16> to vector<4x2xbf16>
    %5 = arith.extf %4 : vector<4x2xbf16> to vector<4x2xf32>
    %c0_4 = arith.constant 0 : index
    %c7_5 = arith.constant 7 : index
    %c0_6 = arith.constant 0 : index
    %6 = vector.load %arg3[%c0_4, %c7_5, %c0_6] : memref<3x8x2xbf16, #tpu.memory_space<vmem>>, vector<1x1x2xbf16>
    %7 = vector.shape_cast %6 : vector<1x1x2xbf16> to vector<1x2xbf16>
    %8 = arith.extf %7 : vector<1x2xbf16> to vector<1x2xf32>
    %9 = vector.broadcast %8 : vector<1x2xf32> to vector<4x2xf32>
    %10 = arith.mulf %5, %9 : vector<4x2xf32>
    %11 = arith.addf %0, %10 : vector<4x2xf32>
    %12 = arith.mulf %5, %5 : vector<4x2xf32>
    %13 = arith.addf %1, %12 : vector<4x2xf32>
    %14 = arith.mulf %8, %8 : vector<1x2xf32>
    %15 = arith.addf %2, %14 : vector<1x2xf32>
    %c0_7 = arith.constant 0 : index
    %c1 = arith.constant 1 : index
    %c7_8 = arith.constant 7 : index
    %c0_9 = arith.constant 0 : index
    %16 = vector.load %arg2[%c0_7, %c1, %c7_8, %c0_9] : memref<4x3x8x2xbf16, #tpu.memory_space<vmem>>, vector<4x1x1x2xbf16>
    %17 = vector.shape_cast %16 : vector<4x1x1x2xbf16> to vector<4x2xbf16>
    %18 = arith.extf %17 : vector<4x2xbf16> to vector<4x2xf32>
    %c1_10 = arith.constant 1 : index
    %c7_11 = arith.constant 7 : index
    %c0_12 = arith.constant 0 : index
    %19 = vector.load %arg3[%c1_10, %c7_11, %c0_12] : memref<3x8x2xbf16, #tpu.memory_space<vmem>>, vector<1x1x2xbf16>
    %20 = vector.shape_cast %19 : vector<1x1x2xbf16> to vector<1x2xbf16>
    %21 = arith.extf %20 : vector<1x2xbf16> to vector<1x2xf32>
    %22 = vector.broadcast %21 : vector<1x2xf32> to vector<4x2xf32>
    %23 = arith.mulf %18, %22 : vector<4x2xf32>
    %24 = arith.addf %11, %23 : vector<4x2xf32>
    %25 = arith.mulf %18, %18 : vector<4x2xf32>
    %26 = arith.addf %13, %25 : vector<4x2xf32>
    %27 = arith.mulf %21, %21 : vector<1x2xf32>
    %28 = arith.addf %15, %27 : vector<1x2xf32>
    %c0_13 = arith.constant 0 : index
    %c2 = arith.constant 2 : index
    %c7_14 = arith.constant 7 : index
    %c0_15 = arith.constant 0 : index
    %29 = vector.load %arg2[%c0_13, %c2, %c7_14, %c0_15] : memref<4x3x8x2xbf16, #tpu.memory_space<vmem>>, vector<4x1x1x2xbf16>
    %30 = vector.shape_cast %29 : vector<4x1x1x2xbf16> to vector<4x2xbf16>
    %31 = arith.extf %30 : vector<4x2xbf16> to vector<4x2xf32>
    %c2_16 = arith.constant 2 : index
    %c7_17 = arith.constant 7 : index
    %c0_18 = arith.constant 0 : index
    %32 = vector.load %arg3[%c2_16, %c7_17, %c0_18] : memref<3x8x2xbf16, #tpu.memory_space<vmem>>, vector<1x1x2xbf16>
    %33 = vector.shape_cast %32 : vector<1x1x2xbf16> to vector<1x2xbf16>
    %34 = arith.extf %33 : vector<1x2xbf16> to vector<1x2xf32>
    %35 = vector.broadcast %34 : vector<1x2xf32> to vector<4x2xf32>
    %36 = arith.mulf %31, %35 : vector<4x2xf32>
    %37 = arith.addf %24, %36 : vector<4x2xf32>
    %38 = arith.mulf %31, %31 : vector<4x2xf32>
    %39 = arith.addf %26, %38 : vector<4x2xf32>
    %40 = arith.mulf %34, %34 : vector<1x2xf32>
    %41 = arith.addf %28, %40 : vector<1x2xf32>
    %42 = vector.broadcast %41 : vector<1x2xf32> to vector<4x2xf32>
    %43 = arith.mulf %39, %42 : vector<4x2xf32>
    %cst_19 = arith.constant 1.000000e-16 : f32
    %44 = vector.broadcast %cst_19 : f32 to vector<4x2xf32>
    %45 = arith.maximumf %43, %44 : vector<4x2xf32>
    %46 = math.rsqrt %45 : vector<4x2xf32>
    %47 = arith.mulf %37, %46 : vector<4x2xf32>
    %cst_20 = arith.constant 1.000000e+00 : f32
    %48 = vector.broadcast %cst_20 : f32 to vector<4x2xf32>
    %49 = arith.subf %48, %47 : vector<4x2xf32>
    %cst_21 = arith.constant dense<0x7F800000> : vector<2xf32>
    %50 = vector.multi_reduction <minimumf>, %49, %cst_21 [0] : vector<4x2xf32> to vector<2xf32>
    %51 = vector.shape_cast %50 : vector<2xf32> to vector<1x2xf32>
    %52 = tpu.iota {dimensions = array<i32: 0>} : vector<4x2xi32>
    %53 = vector.broadcast %51 : vector<1x2xf32> to vector<4x2xf32>
    %54 = arith.cmpf ole, %49, %53 : vector<4x2xf32>
    %c4_i32 = arith.constant 4 : i32
    %55 = vector.broadcast %c4_i32 : i32 to vector<4x2xi32>
    %56 = arith.select %54, %52, %55 : vector<4x2xi1>, vector<4x2xi32>
    %cst_22 = arith.constant dense<2147483647> : vector<2xi32>
    %57 = vector.multi_reduction <minsi>, %56, %cst_22 [0] : vector<4x2xi32> to vector<2xi32>
    %58 = vector.shape_cast %57 : vector<2xi32> to vector<1x2xi32>
    %59 = vector.broadcast %58 : vector<1x2xi32> to vector<4x2xi32>
    %60 = arith.cmpi eq, %52, %59 : vector<4x2xi32>
    %61 = arith.extui %60 : vector<4x2xi1> to vector<4x2xi32>
    %62 = arith.sitofp %61 : vector<4x2xi32> to vector<4x2xf32>
    %c0_23 = arith.constant 0 : index
    %c0_24 = arith.constant 0 : index
    %63 = vector.load %arg1[%c0_23, %c0_24] : memref<4x2xf32, #tpu.memory_space<vmem>>, vector<4x2xf32>
    %cst_25 = arith.constant dense<0xFF800000> : vector<2xf32>
    %64 = vector.multi_reduction <maximumf>, %63, %cst_25 [0] : vector<4x2xf32> to vector<2xf32>
    %65 = vector.shape_cast %64 : vector<2xf32> to vector<1x2xf32>
    %66 = vector.broadcast %65 : vector<1x2xf32> to vector<4x2xf32>
    %67 = arith.subf %63, %66 : vector<4x2xf32>
    %68 = math.exp %67 : vector<4x2xf32>
    %cst_26 = arith.constant dense<0.000000e+00> : vector<2xf32>
    %69 = vector.multi_reduction <add>, %68, %cst_26 [0] : vector<4x2xf32> to vector<2xf32>
    %70 = vector.shape_cast %69 : vector<2xf32> to vector<1x2xf32>
    %71 = math.log %70 : vector<1x2xf32>
    %72 = arith.addf %65, %71 : vector<1x2xf32>
    %73 = arith.mulf %63, %62 : vector<4x2xf32>
    %cst_27 = arith.constant dense<0.000000e+00> : vector<2xf32>
    %74 = vector.multi_reduction <add>, %73, %cst_27 [0] : vector<4x2xf32> to vector<2xf32>
    %75 = vector.shape_cast %74 : vector<2xf32> to vector<1x2xf32>
    %76 = arith.subf %72, %75 : vector<1x2xf32>
    %77 = vector.shape_cast %76 : vector<1x2xf32> to vector<1x1x2xf32>
    %cst_28 = arith.constant dense<0.000000e+00> : vector<1xf32>
    %78 = vector.multi_reduction <add>, %77, %cst_28 [1, 2] : vector<1x1x2xf32> to vector<1xf32>
    %79 = vector.shape_cast %78 : vector<1xf32> to vector<1x1x1xf32>
    %80 = vector.extract %79[0, 0, 0] : f32 from vector<1x1x1xf32>
    %81 = vector.broadcast %80 : f32 to vector<1x1xf32>
    %cst_29 = arith.constant 5.000000e-01 : f32
    %82 = vector.broadcast %cst_29 : f32 to vector<1x1xf32>
    %83 = arith.mulf %81, %82 : vector<1x1xf32>
    %c0_30 = arith.constant 0 : index
    %c0_31 = arith.constant 0 : index
    %c0_32 = arith.constant 0 : index
    %84 = vector.load %arg3[%c0_30, %c0_31, %c0_32] : memref<3x8x2xbf16, #tpu.memory_space<vmem>>, vector<1x8x2xbf16>
    %85 = vector.shape_cast %84 : vector<1x8x2xbf16> to vector<8x2xbf16>
    %86 = arith.extf %85 : vector<8x2xbf16> to vector<8x2xf32>
    %87 = vector.extract_strided_slice %62 {offsets = [0, 0], sizes = [1, 2], strides = [1, 1]} : vector<4x2xf32> to vector<1x2xf32>
    %c0_33 = arith.constant 0 : index
    %c0_34 = arith.constant 0 : index
    %c0_35 = arith.constant 0 : index
    %c0_36 = arith.constant 0 : index
    %88 = vector.load %arg2[%c0_33, %c0_34, %c0_35, %c0_36] : memref<4x3x8x2xbf16, #tpu.memory_space<vmem>>, vector<1x1x8x2xbf16>
    %89 = vector.shape_cast %88 : vector<1x1x8x2xbf16> to vector<8x2xbf16>
    %90 = arith.extf %89 : vector<8x2xbf16> to vector<8x2xf32>
    %91 = vector.broadcast %87 : vector<1x2xf32> to vector<8x2xf32>
    %92 = arith.mulf %91, %90 : vector<8x2xf32>
    %93 = vector.extract_strided_slice %62 {offsets = [1, 0], sizes = [1, 2], strides = [1, 1]} : vector<4x2xf32> to vector<1x2xf32>
    %c1_37 = arith.constant 1 : index
    %c0_38 = arith.constant 0 : index
    %c0_39 = arith.constant 0 : index
    %c0_40 = arith.constant 0 : index
    %94 = vector.load %arg2[%c1_37, %c0_38, %c0_39, %c0_40] : memref<4x3x8x2xbf16, #tpu.memory_space<vmem>>, vector<1x1x8x2xbf16>
    %95 = vector.shape_cast %94 : vector<1x1x8x2xbf16> to vector<8x2xbf16>
    %96 = arith.extf %95 : vector<8x2xbf16> to vector<8x2xf32>
    %97 = vector.broadcast %93 : vector<1x2xf32> to vector<8x2xf32>
    %98 = arith.mulf %97, %96 : vector<8x2xf32>
    %99 = arith.addf %92, %98 : vector<8x2xf32>
    %100 = vector.extract_strided_slice %62 {offsets = [2, 0], sizes = [1, 2], strides = [1, 1]} : vector<4x2xf32> to vector<1x2xf32>
    %c2_41 = arith.constant 2 : index
    %c0_42 = arith.constant 0 : index
    %c0_43 = arith.constant 0 : index
    %c0_44 = arith.constant 0 : index
    %101 = vector.load %arg2[%c2_41, %c0_42, %c0_43, %c0_44] : memref<4x3x8x2xbf16, #tpu.memory_space<vmem>>, vector<1x1x8x2xbf16>
    %102 = vector.shape_cast %101 : vector<1x1x8x2xbf16> to vector<8x2xbf16>
    %103 = arith.extf %102 : vector<8x2xbf16> to vector<8x2xf32>
    %104 = vector.broadcast %100 : vector<1x2xf32> to vector<8x2xf32>
    %105 = arith.mulf %104, %103 : vector<8x2xf32>
    %106 = arith.addf %99, %105 : vector<8x2xf32>
    %107 = vector.extract_strided_slice %62 {offsets = [3, 0], sizes = [1, 2], strides = [1, 1]} : vector<4x2xf32> to vector<1x2xf32>
    %c3 = arith.constant 3 : index
    %c0_45 = arith.constant 0 : index
    %c0_46 = arith.constant 0 : index
    %c0_47 = arith.constant 0 : index
    %108 = vector.load %arg2[%c3, %c0_45, %c0_46, %c0_47] : memref<4x3x8x2xbf16, #tpu.memory_space<vmem>>, vector<1x1x8x2xbf16>
    %109 = vector.shape_cast %108 : vector<1x1x8x2xbf16> to vector<8x2xbf16>
    %110 = arith.extf %109 : vector<8x2xbf16> to vector<8x2xf32>
    %111 = vector.broadcast %107 : vector<1x2xf32> to vector<8x2xf32>
    %112 = arith.mulf %111, %110 : vector<8x2xf32>
    %113 = arith.addf %106, %112 : vector<8x2xf32>
    %114 = arith.subf %113, %86 : vector<8x2xf32>
    %115 = math.absf %114 : vector<8x2xf32>
    %cst_48 = arith.constant 1.000000e+00 : f32
    %116 = vector.broadcast %cst_48 : f32 to vector<8x2xf32>
    %117 = arith.cmpf olt, %115, %116 : vector<8x2xf32>
    %cst_49 = arith.constant 5.000000e-01 : f32
    %118 = vector.broadcast %cst_49 : f32 to vector<8x2xf32>
    %119 = arith.mulf %118, %114 : vector<8x2xf32>
    %120 = arith.mulf %119, %114 : vector<8x2xf32>
    %cst_50 = arith.constant 5.000000e-01 : f32
    %121 = vector.broadcast %cst_50 : f32 to vector<8x2xf32>
    %122 = arith.subf %115, %121 : vector<8x2xf32>
    %123 = arith.select %117, %120, %122 : vector<8x2xi1>, vector<8x2xf32>
    %cst_51 = arith.constant dense<0.000000e+00> : vector<2xf32>
    %124 = vector.multi_reduction <add>, %123, %cst_51 [0] : vector<8x2xf32> to vector<2xf32>
    %125 = vector.shape_cast %124 : vector<2xf32> to vector<1x2xf32>
    %126 = vector.shape_cast %125 : vector<1x2xf32> to vector<1x1x2xf32>
    %cst_52 = arith.constant dense<0.000000e+00> : vector<1xf32>
    %127 = vector.multi_reduction <add>, %126, %cst_52 [1, 2] : vector<1x1x2xf32> to vector<1xf32>
    %128 = vector.shape_cast %127 : vector<1xf32> to vector<1x1x1xf32>
    %129 = vector.extract %128[0, 0, 0] : f32 from vector<1x1x1xf32>
    %130 = vector.broadcast %129 : f32 to vector<1x1xf32>
    %cst_53 = arith.constant 6.250000e-02 : f32
    %131 = vector.broadcast %cst_53 : f32 to vector<1x1xf32>
    %132 = arith.mulf %130, %131 : vector<1x1xf32>
    %c1_54 = arith.constant 1 : index
    %c0_55 = arith.constant 0 : index
    %c0_56 = arith.constant 0 : index
    %133 = vector.load %arg3[%c1_54, %c0_55, %c0_56] : memref<3x8x2xbf16, #tpu.memory_space<vmem>>, vector<1x8x2xbf16>
    %134 = vector.shape_cast %133 : vector<1x8x2xbf16> to vector<8x2xbf16>
    %135 = arith.extf %134 : vector<8x2xbf16> to vector<8x2xf32>
    %136 = vector.extract_strided_slice %62 {offsets = [0, 0], sizes = [1, 2], strides = [1, 1]} : vector<4x2xf32> to vector<1x2xf32>
    %c0_57 = arith.constant 0 : index
    %c1_58 = arith.constant 1 : index
    %c0_59 = arith.constant 0 : index
    %c0_60 = arith.constant 0 : index
    %137 = vector.load %arg2[%c0_57, %c1_58, %c0_59, %c0_60] : memref<4x3x8x2xbf16, #tpu.memory_space<vmem>>, vector<1x1x8x2xbf16>
    %138 = vector.shape_cast %137 : vector<1x1x8x2xbf16> to vector<8x2xbf16>
    %139 = arith.extf %138 : vector<8x2xbf16> to vector<8x2xf32>
    %140 = vector.broadcast %136 : vector<1x2xf32> to vector<8x2xf32>
    %141 = arith.mulf %140, %139 : vector<8x2xf32>
    %142 = vector.extract_strided_slice %62 {offsets = [1, 0], sizes = [1, 2], strides = [1, 1]} : vector<4x2xf32> to vector<1x2xf32>
    %c1_61 = arith.constant 1 : index
    %c1_62 = arith.constant 1 : index
    %c0_63 = arith.constant 0 : index
    %c0_64 = arith.constant 0 : index
    %143 = vector.load %arg2[%c1_61, %c1_62, %c0_63, %c0_64] : memref<4x3x8x2xbf16, #tpu.memory_space<vmem>>, vector<1x1x8x2xbf16>
    %144 = vector.shape_cast %143 : vector<1x1x8x2xbf16> to vector<8x2xbf16>
    %145 = arith.extf %144 : vector<8x2xbf16> to vector<8x2xf32>
    %146 = vector.broadcast %142 : vector<1x2xf32> to vector<8x2xf32>
    %147 = arith.mulf %146, %145 : vector<8x2xf32>
    %148 = arith.addf %141, %147 : vector<8x2xf32>
    %149 = vector.extract_strided_slice %62 {offsets = [2, 0], sizes = [1, 2], strides = [1, 1]} : vector<4x2xf32> to vector<1x2xf32>
    %c2_65 = arith.constant 2 : index
    %c1_66 = arith.constant 1 : index
    %c0_67 = arith.constant 0 : index
    %c0_68 = arith.constant 0 : index
    %150 = vector.load %arg2[%c2_65, %c1_66, %c0_67, %c0_68] : memref<4x3x8x2xbf16, #tpu.memory_space<vmem>>, vector<1x1x8x2xbf16>
    %151 = vector.shape_cast %150 : vector<1x1x8x2xbf16> to vector<8x2xbf16>
    %152 = arith.extf %151 : vector<8x2xbf16> to vector<8x2xf32>
    %153 = vector.broadcast %149 : vector<1x2xf32> to vector<8x2xf32>
    %154 = arith.mulf %153, %152 : vector<8x2xf32>
    %155 = arith.addf %148, %154 : vector<8x2xf32>
    %156 = vector.extract_strided_slice %62 {offsets = [3, 0], sizes = [1, 2], strides = [1, 1]} : vector<4x2xf32> to vector<1x2xf32>
    %c3_69 = arith.constant 3 : index
    %c1_70 = arith.constant 1 : index
    %c0_71 = arith.constant 0 : index
    %c0_72 = arith.constant 0 : index
    %157 = vector.load %arg2[%c3_69, %c1_70, %c0_71, %c0_72] : memref<4x3x8x2xbf16, #tpu.memory_space<vmem>>, vector<1x1x8x2xbf16>
    %158 = vector.shape_cast %157 : vector<1x1x8x2xbf16> to vector<8x2xbf16>
    %159 = arith.extf %158 : vector<8x2xbf16> to vector<8x2xf32>
    %160 = vector.broadcast %156 : vector<1x2xf32> to vector<8x2xf32>
    %161 = arith.mulf %160, %159 : vector<8x2xf32>
    %162 = arith.addf %155, %161 : vector<8x2xf32>
    %163 = arith.subf %162, %135 : vector<8x2xf32>
    %164 = math.absf %163 : vector<8x2xf32>
    %cst_73 = arith.constant 1.000000e+00 : f32
    %165 = vector.broadcast %cst_73 : f32 to vector<8x2xf32>
    %166 = arith.cmpf olt, %164, %165 : vector<8x2xf32>
    %cst_74 = arith.constant 5.000000e-01 : f32
    %167 = vector.broadcast %cst_74 : f32 to vector<8x2xf32>
    %168 = arith.mulf %167, %163 : vector<8x2xf32>
    %169 = arith.mulf %168, %163 : vector<8x2xf32>
    %cst_75 = arith.constant 5.000000e-01 : f32
    %170 = vector.broadcast %cst_75 : f32 to vector<8x2xf32>
    %171 = arith.subf %164, %170 : vector<8x2xf32>
    %172 = arith.select %166, %169, %171 : vector<8x2xi1>, vector<8x2xf32>
    %cst_76 = arith.constant dense<0.000000e+00> : vector<2xf32>
    %173 = vector.multi_reduction <add>, %172, %cst_76 [0] : vector<8x2xf32> to vector<2xf32>
    %174 = vector.shape_cast %173 : vector<2xf32> to vector<1x2xf32>
    %175 = vector.shape_cast %174 : vector<1x2xf32> to vector<1x1x2xf32>
    %cst_77 = arith.constant dense<0.000000e+00> : vector<1xf32>
    %176 = vector.multi_reduction <add>, %175, %cst_77 [1, 2] : vector<1x1x2xf32> to vector<1xf32>
    %177 = vector.shape_cast %176 : vector<1xf32> to vector<1x1x1xf32>
    %178 = vector.extract %177[0, 0, 0] : f32 from vector<1x1x1xf32>
    %179 = vector.broadcast %178 : f32 to vector<1x1xf32>
    %cst_78 = arith.constant 6.250000e-02 : f32
    %180 = vector.broadcast %cst_78 : f32 to vector<1x1xf32>
    %181 = arith.mulf %179, %180 : vector<1x1xf32>
    %c2_79 = arith.constant 2 : index
    %c0_80 = arith.constant 0 : index
    %c0_81 = arith.constant 0 : index
    %182 = vector.load %arg3[%c2_79, %c0_80, %c0_81] : memref<3x8x2xbf16, #tpu.memory_space<vmem>>, vector<1x8x2xbf16>
    %183 = vector.shape_cast %182 : vector<1x8x2xbf16> to vector<8x2xbf16>
    %184 = arith.extf %183 : vector<8x2xbf16> to vector<8x2xf32>
    %185 = vector.extract_strided_slice %62 {offsets = [0, 0], sizes = [1, 2], strides = [1, 1]} : vector<4x2xf32> to vector<1x2xf32>
    %c0_82 = arith.constant 0 : index
    %c2_83 = arith.constant 2 : index
    %c0_84 = arith.constant 0 : index
    %c0_85 = arith.constant 0 : index
    %186 = vector.load %arg2[%c0_82, %c2_83, %c0_84, %c0_85] : memref<4x3x8x2xbf16, #tpu.memory_space<vmem>>, vector<1x1x8x2xbf16>
    %187 = vector.shape_cast %186 : vector<1x1x8x2xbf16> to vector<8x2xbf16>
    %188 = arith.extf %187 : vector<8x2xbf16> to vector<8x2xf32>
    %189 = vector.broadcast %185 : vector<1x2xf32> to vector<8x2xf32>
    %190 = arith.mulf %189, %188 : vector<8x2xf32>
    %191 = vector.extract_strided_slice %62 {offsets = [1, 0], sizes = [1, 2], strides = [1, 1]} : vector<4x2xf32> to vector<1x2xf32>
    %c1_86 = arith.constant 1 : index
    %c2_87 = arith.constant 2 : index
    %c0_88 = arith.constant 0 : index
    %c0_89 = arith.constant 0 : index
    %192 = vector.load %arg2[%c1_86, %c2_87, %c0_88, %c0_89] : memref<4x3x8x2xbf16, #tpu.memory_space<vmem>>, vector<1x1x8x2xbf16>
    %193 = vector.shape_cast %192 : vector<1x1x8x2xbf16> to vector<8x2xbf16>
    %194 = arith.extf %193 : vector<8x2xbf16> to vector<8x2xf32>
    %195 = vector.broadcast %191 : vector<1x2xf32> to vector<8x2xf32>
    %196 = arith.mulf %195, %194 : vector<8x2xf32>
    %197 = arith.addf %190, %196 : vector<8x2xf32>
    %198 = vector.extract_strided_slice %62 {offsets = [2, 0], sizes = [1, 2], strides = [1, 1]} : vector<4x2xf32> to vector<1x2xf32>
    %c2_90 = arith.constant 2 : index
    %c2_91 = arith.constant 2 : index
    %c0_92 = arith.constant 0 : index
    %c0_93 = arith.constant 0 : index
    %199 = vector.load %arg2[%c2_90, %c2_91, %c0_92, %c0_93] : memref<4x3x8x2xbf16, #tpu.memory_space<vmem>>, vector<1x1x8x2xbf16>
    %200 = vector.shape_cast %199 : vector<1x1x8x2xbf16> to vector<8x2xbf16>
    %201 = arith.extf %200 : vector<8x2xbf16> to vector<8x2xf32>
    %202 = vector.broadcast %198 : vector<1x2xf32> to vector<8x2xf32>
    %203 = arith.mulf %202, %201 : vector<8x2xf32>
    %204 = arith.addf %197, %203 : vector<8x2xf32>
    %205 = vector.extract_strided_slice %62 {offsets = [3, 0], sizes = [1, 2], strides = [1, 1]} : vector<4x2xf32> to vector<1x2xf32>
    %c3_94 = arith.constant 3 : index
    %c2_95 = arith.constant 2 : index
    %c0_96 = arith.constant 0 : index
    %c0_97 = arith.constant 0 : index
    %206 = vector.load %arg2[%c3_94, %c2_95, %c0_96, %c0_97] : memref<4x3x8x2xbf16, #tpu.memory_space<vmem>>, vector<1x1x8x2xbf16>
    %207 = vector.shape_cast %206 : vector<1x1x8x2xbf16> to vector<8x2xbf16>
    %208 = arith.extf %207 : vector<8x2xbf16> to vector<8x2xf32>
    %209 = vector.broadcast %205 : vector<1x2xf32> to vector<8x2xf32>
    %210 = arith.mulf %209, %208 : vector<8x2xf32>
    %211 = arith.addf %204, %210 : vector<8x2xf32>
    %212 = arith.subf %211, %184 : vector<8x2xf32>
    %213 = math.absf %212 : vector<8x2xf32>
    %cst_98 = arith.constant 1.000000e+00 : f32
    %214 = vector.broadcast %cst_98 : f32 to vector<8x2xf32>
    %215 = arith.cmpf olt, %213, %214 : vector<8x2xf32>
    %cst_99 = arith.constant 5.000000e-01 : f32
    %216 = vector.broadcast %cst_99 : f32 to vector<8x2xf32>
    %217 = arith.mulf %216, %212 : vector<8x2xf32>
    %218 = arith.mulf %217, %212 : vector<8x2xf32>
    %cst_100 = arith.constant 5.000000e-01 : f32
    %219 = vector.broadcast %cst_100 : f32 to vector<8x2xf32>
    %220 = arith.subf %213, %219 : vector<8x2xf32>
    %221 = arith.select %215, %218, %220 : vector<8x2xi1>, vector<8x2xf32>
    %cst_101 = arith.constant dense<0.000000e+00> : vector<2xf32>
    %222 = vector.multi_reduction <add>, %221, %cst_101 [0] : vector<8x2xf32> to vector<2xf32>
    %223 = vector.shape_cast %222 : vector<2xf32> to vector<1x2xf32>
    %224 = vector.shape_cast %223 : vector<1x2xf32> to vector<1x1x2xf32>
    %cst_102 = arith.constant dense<0.000000e+00> : vector<1xf32>
    %225 = vector.multi_reduction <add>, %224, %cst_102 [1, 2] : vector<1x1x2xf32> to vector<1xf32>
    %226 = vector.shape_cast %225 : vector<1xf32> to vector<1x1x1xf32>
    %227 = vector.extract %226[0, 0, 0] : f32 from vector<1x1x1xf32>
    %228 = vector.broadcast %227 : f32 to vector<1x1xf32>
    %cst_103 = arith.constant 6.250000e-02 : f32
    %229 = vector.broadcast %cst_103 : f32 to vector<1x1xf32>
    %230 = arith.mulf %228, %229 : vector<1x1xf32>
    %231 = tpu.iota {dimensions = array<i32: 1>} : vector<8x128xi32>
    %c0_i32 = arith.constant 0 : i32
    %232 = vector.broadcast %c0_i32 : i32 to vector<8x128xi32>
    %233 = arith.cmpi eq, %231, %232 : vector<8x128xi32>
    %cst_104 = arith.constant 0.000000e+00 : f32
    %234 = vector.broadcast %cst_104 : f32 to vector<8x128xf32>
    %235 = vector.shape_cast %83 : vector<1x1xf32> to vector<1x1xf32>
    %236 = vector.broadcast %235 : vector<1x1xf32> to vector<8x128xf32>
    %237 = arith.select %233, %236, %234 : vector<8x128xi1>, vector<8x128xf32>
    %c1_i32 = arith.constant 1 : i32
    %238 = vector.broadcast %c1_i32 : i32 to vector<8x128xi32>
    %239 = arith.cmpi eq, %231, %238 : vector<8x128xi32>
    %240 = vector.shape_cast %132 : vector<1x1xf32> to vector<1x1xf32>
    %241 = vector.broadcast %240 : vector<1x1xf32> to vector<8x128xf32>
    %242 = arith.select %239, %241, %237 : vector<8x128xi1>, vector<8x128xf32>
    %c2_i32 = arith.constant 2 : i32
    %243 = vector.broadcast %c2_i32 : i32 to vector<8x128xi32>
    %244 = arith.cmpi eq, %231, %243 : vector<8x128xi32>
    %245 = vector.shape_cast %181 : vector<1x1xf32> to vector<1x1xf32>
    %246 = vector.broadcast %245 : vector<1x1xf32> to vector<8x128xf32>
    %247 = arith.select %244, %246, %242 : vector<8x128xi1>, vector<8x128xf32>
    %c3_i32 = arith.constant 3 : i32
    %248 = vector.broadcast %c3_i32 : i32 to vector<8x128xi32>
    %249 = arith.cmpi eq, %231, %248 : vector<8x128xi32>
    %250 = vector.shape_cast %230 : vector<1x1xf32> to vector<1x1xf32>
    %251 = vector.broadcast %250 : vector<1x1xf32> to vector<8x128xf32>
    %252 = arith.select %249, %251, %247 : vector<8x128xi1>, vector<8x128xf32>
    %253 = vector.shape_cast %252 : vector<8x128xf32> to vector<1x8x128xf32>
    %c0_105 = arith.constant 0 : index
    %c0_106 = arith.constant 0 : index
    %c0_107 = arith.constant 0 : index
    %254 = vector.load %arg4[%c0_105, %c0_106, %c0_107] : memref<1x8x128xf32, #tpu.memory_space<vmem>>, vector<1x8x128xf32>
    tpu.vector_store %arg4[%c0_105, %c0_106, %c0_107], %253 {strides = array<i32>} : memref<1x8x128xf32, #tpu.memory_space<vmem>>, vector<1x8x128xf32>,
    return
  }
  func.func @transform_0(%arg0: i32) -> (i32, i32) {
    %c0_i32 = arith.constant 0 : i32
    %c0_i32_0 = arith.constant 0 : i32
    return %c0_i32, %arg0 : i32, i32
  }
  func.func @transform_1(%arg0: i32) -> (i32, i32, i32, i32) {
    %c0_i32 = arith.constant 0 : i32
    %c0_i32_0 = arith.constant 0 : i32
    %c0_i32_1 = arith.constant 0 : i32
    %c0_i32_2 = arith.constant 0 : i32
    return %c0_i32, %c0_i32_0, %c0_i32_1, %arg0 : i32, i32, i32, i32
  }
  func.func @transform_2(%arg0: i32) -> (i32, i32, i32) {
    %c0_i32 = arith.constant 0 : i32
    %c0_i32_0 = arith.constant 0 : i32
    %c0_i32_1 = arith.constant 0 : i32
    return %c0_i32, %c0_i32_0, %arg0 : i32, i32, i32
  }
  func.func @transform_3(%arg0: i32) -> (i32, i32, i32) {
    %c0_i32 = arith.constant 0 : i32
    %c0_i32_0 = arith.constant 0 : i32
    %c0_i32_1 = arith.constant 0 : i32
    return %arg0, %c0_i32, %c0_i32_0 : i32, i32, i32
  }
}

</mosaic_0001>

<llo_original>
// kernel: mtp_loss.1
$region0: #{mtp_loss.1}
  #allocation0 [shape = 'u32[]', space=smem, size = 0x4, offset = 0x4, fixed_abs, tag = 'smem constant byte address 0x4 - core index']
  #allocation1 [shape = 'u32[144,128]{1,0:T(1,128)}', space=vmem, size = 0x12000, scoped, tag = 'internal scratch']
  %s0 = inlined_call_operand.vmem [shape: f32[4,2], index: 0, kind: input, shape index: {}]
  %s1 = inlined_call_operand.vmem [shape: bf16[4,3,8,2], index: 1, kind: input, shape index: {}]
  %s2 = inlined_call_operand.vmem [shape: bf16[3,8,2], index: 2, kind: input, shape index: {}]
  %s3 = inlined_call_operand.vmem [shape: f32[1,8,128], index: 3, kind: output, shape index: {}]
  %s4 = sld [smem:[#allocation0]]
  $region22: #{mtp_loss.1} parent=0
    _
  %s6 = ssub.s32 1, %s4
  %s7 = scalar_select 0, %s6, %s4
  // Predicated region
  $region2: #{mtp_loss.1} parent=0 // pred_check
    _
  $region3: #{mtp_loss.1} parent=0 // pred_check_branch
    %9 = sbr.rel (0) target = $region5
  $region4: #{mtp_loss.1} parent=0 // pred_region
    _
  $region5: #{mtp_loss.1} parent=0 // pred_fallthru
    _
  // Predicated region
  $region6: #{mtp_loss.1} parent=0 // pred_check
    _
  $region7: #{mtp_loss.1} parent=0 // pred_check_branch
    %11 = sbr.rel (0) target = $region9
  $region8: #{mtp_loss.1} parent=0 // pred_region
    _
  $region9: #{mtp_loss.1} parent=0 // pred_fallthru
    _
  // Predicated region
  $region10: #{mtp_loss.1} parent=0 // pred_check
    _
  $region11: #{mtp_loss.1} parent=0 // pred_check_branch
    %13 = sbr.rel (0) target = $region13
  $region12: #{mtp_loss.1} parent=0 // pred_region
    _
  $region13: #{mtp_loss.1} parent=0 // pred_fallthru
    _
  %v14 = vld [vmem:[%s1] sm:$0x8]
  %v15 = vld [vmem:[%s1 + $0xc] sm:$0x8]
  %v16 = vld [vmem:[%s1 + $0x18] sm:$0x8]
  %v17 = vld [vmem:[%s1 + $0x24] sm:$0x8]
  %v18 = vunpack.c.l.bf16 %v14
  %v19 = vunpack.c.l.bf16 %v15
  %v20 = vunpack.c.l.bf16 %v16
  %v21 = vunpack.c.l.bf16 %v17
  %v22 = vld [vmem:[%s2] sm:$0x8]
  %v23 = vunpack.c.l.bf16 %v22
  %v24 = vlaneseq
  %v25 = vshrl.u32 %v24, 7
  %v26 = vsub.s32 7, %v25
  %v27 = vrot.slane %v23, %v26
  %v28 = vmul.f32 %v18, %v27
  %v29 = vmul.f32 %v19, %v27
  %v30 = vmul.f32 %v20, %v27
  %v31 = vmul.f32 %v21, %v27
  %v32 = vadd.f32 %v28, 0.0
  %v33 = vadd.f32 %v29, 0.0
  %v34 = vadd.f32 %v30, 0.0
  %v35 = vadd.f32 %v31, 0.0
  %v36 = vmul.f32 %v18, %v18
  %v37 = vmul.f32 %v19, %v19
  %v38 = vmul.f32 %v20, %v20
  %v39 = vmul.f32 %v21, %v21
  %v40 = vadd.f32 %v36, 0.0
  %v41 = vadd.f32 %v37, 0.0
  %v42 = vadd.f32 %v38, 0.0
  %v43 = vadd.f32 %v39, 0.0
  %v44 = vmul.f32 %v23, %v23
  %v45 = vadd.f32 %v44, 0.0
  %s46 = scalar_lea.vmem %s1, 4
  %v47 = vld [vmem:[%s46] sm:$0x8]
  %v48 = vld [vmem:[%s46 + $0xc] sm:$0x8]
  %v49 = vld [vmem:[%s46 + $0x18] sm:$0x8]
  %v50 = vld [vmem:[%s46 + $0x24] sm:$0x8]
  %v51 = vunpack.c.l.bf16 %v47
  %v52 = vunpack.c.l.bf16 %v48
  %v53 = vunpack.c.l.bf16 %v49
  %v54 = vunpack.c.l.bf16 %v50
  %s55 = scalar_lea.vmem %s2, 4
  %v56 = vld [vmem:[%s55] sm:$0x8]
  %v57 = vunpack.c.l.bf16 %v56
  %v58 = vlaneseq
  %v59 = vshrl.u32 %v58, 7
  %v60 = vsub.s32 7, %v59
  %v61 = vrot.slane %v57, %v60
  %v62 = vmul.f32 %v51, %v61
  %v63 = vmul.f32 %v52, %v61
  %v64 = vmul.f32 %v53, %v61
  %v65 = vmul.f32 %v54, %v61
  %v66 = vadd.f32 %v32, %v62
  %v67 = vadd.f32 %v33, %v63
  %v68 = vadd.f32 %v34, %v64
  %v69 = vadd.f32 %v35, %v65
  %v70 = vmul.f32 %v51, %v51
  %v71 = vmul.f32 %v52, %v52
  %v72 = vmul.f32 %v53, %v53
  %v73 = vmul.f32 %v54, %v54
  %v74 = vadd.f32 %v40, %v70
  %v75 = vadd.f32 %v41, %v71
  %v76 = vadd.f32 %v42, %v72
  %v77 = vadd.f32 %v43, %v73
  %v78 = vmul.f32 %v57, %v57
  %v79 = vadd.f32 %v45, %v78
  %s80 = scalar_lea.vmem %s1, 8
  %v81 = vld [vmem:[%s80] sm:$0x8]
  %v82 = vld [vmem:[%s80 + $0xc] sm:$0x8]
  %v83 = vld [vmem:[%s80 + $0x18] sm:$0x8]
  %v84 = vld [vmem:[%s80 + $0x24] sm:$0x8]
  %v85 = vunpack.c.l.bf16 %v81
  %v86 = vunpack.c.l.bf16 %v82
  %v87 = vunpack.c.l.bf16 %v83
  %v88 = vunpack.c.l.bf16 %v84
  %s89 = scalar_lea.vmem %s2, 8
  %v90 = vld [vmem:[%s89] sm:$0x8]
  %v91 = vunpack.c.l.bf16 %v90
  %v92 = vlaneseq
  %v93 = vshrl.u32 %v92, 7
  %v94 = vsub.s32 7, %v93
  %v95 = vrot.slane %v91, %v94
  %v96 = vmul.f32 %v85, %v95
  %v97 = vmul.f32 %v86, %v95
  %v98 = vmul.f32 %v87, %v95
  %v99 = vmul.f32 %v88, %v95
  %v100 = vadd.f32 %v66, %v96
  %v101 = vadd.f32 %v67, %v97
  %v102 = vadd.f32 %v68, %v98
  %v103 = vadd.f32 %v69, %v99
  %v104 = vmul.f32 %v85, %v85
  %v105 = vmul.f32 %v86, %v86
  %v106 = vmul.f32 %v87, %v87
  %v107 = vmul.f32 %v88, %v88
  %v108 = vadd.f32 %v74, %v104
  %v109 = vadd.f32 %v75, %v105
  %v110 = vadd.f32 %v76, %v106
  %v111 = vadd.f32 %v77, %v107
  %v112 = vmul.f32 %v91, %v91
  %v113 = vadd.f32 %v79, %v112
  %v114 = vlaneseq
  %v115 = vshrl.u32 %v114, 7
  %v116 = vsub.s32 7, %v115
  %v117 = vrot.slane %v113, %v116
  %v118 = vmul.f32 %v108, %v117
  %v119 = vmul.f32 %v109, %v117
  %v120 = vmul.f32 %v110, %v117
  %v121 = vmul.f32 %v111, %v117
  %v122 = vmax.f32 %v118, 1e-16
  %v123 = vmax.f32 %v119, 1e-16
  %v124 = vmax.f32 %v120, 1e-16
  %v125 = vmax.f32 %v121, 1e-16
  %v126 = vrsqrt.pop %v122
  %v127 = vrsqrt.pop %v123
  %v128 = vrsqrt.pop %v124
  %v129 = vrsqrt.pop %v125
  %v130 = vmul.f32 %v100, %v126
  %v131 = vmul.f32 %v101, %v127
  %v132 = vmul.f32 %v102, %v128
  %v133 = vmul.f32 %v103, %v129
  %v134 = vsub.f32 1.0, %v130
  %v135 = vsub.f32 1.0, %v131
  %v136 = vsub.f32 1.0, %v132
  %v137 = vsub.f32 1.0, %v133
  %vm138 = vcmask 15367
  %v139 = vsel %vm138, %v134, inf
  %v140 = vsel %vm138, %v135, inf
  %v141 = vsel %vm138, %v136, inf
  %v142 = vsel %vm138, %v137, inf
  %v143 = vmin.f32 %v139, %v140
  %v144 = vmin.f32 %v141, %v142
  %v145 = vmin.f32 %v143, %v144
  %v146 = vlaneseq
  %v147 = vshrl.u32 %v146, 7
  %v148 = vlaneseq
  %v149 = vshrl.u32 %v148, 7
  %v150 = vsub.s32 7, %v149
  %v151 = vrot.slane %v145, %v150
  %vm152 = vcmp.le.f32.partialorder %v134, %v151
  %vm153 = vcmp.le.f32.partialorder %v135, %v151
  %vm154 = vcmp.le.f32.partialorder %v136, %v151
  %vm155 = vcmp.le.f32.partialorder %v137, %v151
  %v156 = vrot.slane %v147, 1
  %v157 = vrot.slane %v147, 2
  %v158 = vrot.slane %v147, 3
  %v159 = vrot.slane %v147, 4
  %v160 = vsel %vm152, %v156, 4
  %v161 = vsel %vm153, %v157, 4
  %v162 = vsel %vm154, %v158, 4
  %v163 = vsel %vm155, %v159, 4
  %v164 = vsel %vm138, %v160, 2147483647
  %v165 = vsel %vm138, %v161, 2147483647
  %v166 = vsel %vm138, %v162, 2147483647
  %v167 = vsel %vm138, %v163, 2147483647
  %vm168 = vcmp.lt.s32.totalorder %v164, %v165
  %v169 = vsel %vm168, %v164, %v165
  %vm170 = vcmp.lt.s32.totalorder %v166, %v167
  %v171 = vsel %vm170, %v166, %v167
  %vm172 = vcmp.lt.s32.totalorder %v169, %v171
  %v173 = vsel %vm172, %v169, %v171
  %v174 = vlaneseq
  %v175 = vshrl.u32 %v174, 7
  %v176 = vsub.s32 7, %v175
  %v177 = vrot.slane %v173, %v176
  %vm178 = vcmp.eq.s32.totalorder %v147, %v177
  %v179 = vsel %vm178, 1, 0
  %v180 = vcvt.s32.f32 %v179
  %v181 = vld [vmem:[%s0] sm:$0xf]
  %vm182 = vcmask 11264
  %v183 = vsel %vm182, %v181, -inf
  %v184 = vrot.slane %v183, 4
  %v185 = vmax.f32 %v183, %v184
  %v186 = vrot.slane %v185, 2
  %v187 = vmax.f32 %v185, %v186
  %v188 = vrot.slane %v187, 1
  %v189 = vmax.f32 %v187, %v188
  %v190 = vsub.f32 %v181, %v189
  %v191 = vmul.f32 %v190, 1.442695
  %v192 = vpow.pop %v191
  %v193 = vsel %vm182, %v192, 0.0
  %v194 = vrot.slane %v193, 4
  %v195 = vadd.f32 %v193, %v194
  %v196 = vrot.slane %v195, 2
  %v197 = vadd.f32 %v195, %v196
  %v198 = vrot.slane %v197, 1
  %v199 = vadd.f32 %v197, %v198
  %v200 = vlog2.pop %v199
  %v201 = vmul.f32 %v200, 0.6931472
  %v202 = vadd.f32 %v189, %v201
  %v203 = vmul.f32 %v181, %v180
  %v204 = vsel %vm182, %v203, 0.0
  %v205 = vrot.slane %v204, 4
  %v206 = vadd.f32 %v204, %v205
  %v207 = vrot.slane %v206, 2
  %v208 = vadd.f32 %v206, %v207
  %v209 = vrot.slane %v208, 1
  %v210 = vadd.f32 %v208, %v209
  %v211 = vsub.f32 %v202, %v210
  %vm212 = vcmask 8192
  %v213 = vsel %vm212, %v211, 0.0
  %214 = vadd.xlane.f32.xlu0 %v213
  %v215 = vpop.xlane.xlu0 %214
  %v216 = vrot.slane %v215, 4
  %v217 = vadd.f32 %v215, %v216
  %v218 = vrot.slane %v217, 2
  %v219 = vadd.f32 %v217, %v218
  %v220 = vrot.slane %v219, 1
  %v221 = vadd.f32 %v219, %v220
  %s222 = vtos %v221
  %v223 = vstv %s222
  %v224 = vmul.f32 %v223, 0.5
  %v225 = vld [vmem:[%s2] sm:$0xf]
  %v226 = vunpack.c.l.bf16 %v225
  %v227 = vld [vmem:[%s1] sm:$0xf]
  %v228 = vunpack.c.l.bf16 %v227
  %v229 = vlaneseq
  %v230 = vshrl.u32 %v229, 7
  %v231 = vsub.s32 0, %v230
  %v232 = vrot.slane %v180, %v231
  %v233 = vmul.f32 %v232, %v228
  %s234 = scalar_lea.vmem %s1, 12
  %v235 = vld [vmem:[%s234] sm:$0xf]
  %v236 = vunpack.c.l.bf16 %v235
  %v237 = vlaneseq
  %v238 = vshrl.u32 %v237, 7
  %v239 = vsub.s32 1, %v238
  %v240 = vrot.slane %v180, %v239
  %v241 = vmul.f32 %v240, %v236
  %v242 = vadd.f32 %v233, %v241
  %s243 = scalar_lea.vmem %s1, 24
  %v244 = vld [vmem:[%s243] sm:$0xf]
  %v245 = vunpack.c.l.bf16 %v244
  %v246 = vlaneseq
  %v247 = vshrl.u32 %v246, 7
  %v248 = vsub.s32 2, %v247
  %v249 = vrot.slane %v180, %v248
  %v250 = vmul.f32 %v249, %v245
  %v251 = vadd.f32 %v242, %v250
  %s252 = scalar_lea.vmem %s1, 36
  %v253 = vld [vmem:[%s252] sm:$0xf]
  %v254 = vunpack.c.l.bf16 %v253
  %v255 = vlaneseq
  %v256 = vshrl.u32 %v255, 7
  %v257 = vsub.s32 3, %v256
  %v258 = vrot.slane %v180, %v257
  %v259 = vmul.f32 %v258, %v254
  %v260 = vadd.f32 %v251, %v259
  %v261 = vsub.f32 %v260, %v226
  %v262 = vand.u32 2147483647, %v261
  %vm263 = vcmp.lt.f32.partialorder %v262, 1.0
  %v264 = vmul.f32 %v261, 0.5
  %v265 = vmul.f32 %v264, %v261
  %v266 = vsub.f32 %v262, 0.5
  %v267 = vsel %vm263, %v265, %v266
  %vm268 = vcmask 15360
  %v269 = vsel %vm268, %v267, 0.0
  %v270 = vrot.slane %v269, 4
  %v271 = vadd.f32 %v269, %v270
  %v272 = vrot.slane %v271, 2
  %v273 = vadd.f32 %v271, %v272
  %v274 = vrot.slane %v273, 1
  %v275 = vadd.f32 %v273, %v274
  %v276 = vsel %vm212, %v275, 0.0
  %277 = vadd.xlane.f32.xlu0 %v276
  %v278 = vpop.xlane.xlu0 %277
  %v279 = vrot.slane %v278, 4
  %v280 = vadd.f32 %v278, %v279
  %v281 = vrot.slane %v280, 2
  %v282 = vadd.f32 %v280, %v281
  %v283 = vrot.slane %v282, 1
  %v284 = vadd.f32 %v282, %v283
  %s285 = vtos %v284
  %v286 = vstv %s285
  %v287 = vmul.f32 %v286, 0.0625
  %v288 = vld [vmem:[%s55] sm:$0xf]
  %v289 = vunpack.c.l.bf16 %v288
  %v290 = vld [vmem:[%s46] sm:$0xf]
  %v291 = vunpack.c.l.bf16 %v290
  %v292 = vmul.f32 %v232, %v291
  %s293 = scalar_lea.vmem %s1, 16
  %v294 = vld [vmem:[%s293] sm:$0xf]
  %v295 = vunpack.c.l.bf16 %v294
  %v296 = vmul.f32 %v240, %v295
  %v297 = vadd.f32 %v292, %v296
  %s298 = scalar_lea.vmem %s1, 28
  %v299 = vld [vmem:[%s298] sm:$0xf]
  %v300 = vunpack.c.l.bf16 %v299
  %v301 = vmul.f32 %v249, %v300
  %v302 = vadd.f32 %v297, %v301
  %s303 = scalar_lea.vmem %s1, 40
  %v304 = vld [vmem:[%s303] sm:$0xf]
  %v305 = vunpack.c.l.bf16 %v304
  %v306 = vmul.f32 %v258, %v305
  %v307 = vadd.f32 %v302, %v306
  %v308 = vsub.f32 %v307, %v289
  %v309 = vand.u32 2147483647, %v308
  %vm310 = vcmp.lt.f32.partialorder %v309, 1.0
  %v311 = vmul.f32 %v308, 0.5
  %v312 = vmul.f32 %v311, %v308
  %v313 = vsub.f32 %v309, 0.5
  %v314 = vsel %vm310, %v312, %v313
  %v315 = vsel %vm268, %v314, 0.0
  %v316 = vrot.slane %v315, 4
  %v317 = vadd.f32 %v315, %v316
  %v318 = vrot.slane %v317, 2
  %v319 = vadd.f32 %v317, %v318
  %v320 = vrot.slane %v319, 1
  %v321 = vadd.f32 %v319, %v320
  %v322 = vsel %vm212, %v321, 0.0
  %323 = vadd.xlane.f32.xlu0 %v322
  %v324 = vpop.xlane.xlu0 %323
  %v325 = vrot.slane %v324, 4
  %v326 = vadd.f32 %v324, %v325
  %v327 = vrot.slane %v326, 2
  %v328 = vadd.f32 %v326, %v327
  %v329 = vrot.slane %v328, 1
  %v330 = vadd.f32 %v328, %v329
  %s331 = vtos %v330
  %v332 = vstv %s331
  %v333 = vmul.f32 %v332, 0.0625
  %v334 = vld [vmem:[%s89] sm:$0xf]
  %v335 = vunpack.c.l.bf16 %v334
  %v336 = vld [vmem:[%s80] sm:$0xf]
  %v337 = vunpack.c.l.bf16 %v336
  %v338 = vmul.f32 %v232, %v337
  %s339 = scalar_lea.vmem %s1, 20
  %v340 = vld [vmem:[%s339] sm:$0xf]
  %v341 = vunpack.c.l.bf16 %v340
  %v342 = vmul.f32 %v240, %v341
  %v343 = vadd.f32 %v338, %v342
  %s344 = scalar_lea.vmem %s1, 32
  %v345 = vld [vmem:[%s344] sm:$0xf]
  %v346 = vunpack.c.l.bf16 %v345
  %v347 = vmul.f32 %v249, %v346
  %v348 = vadd.f32 %v343, %v347
  %s349 = scalar_lea.vmem %s1, 44
  %v350 = vld [vmem:[%s349] sm:$0xf]
  %v351 = vunpack.c.l.bf16 %v350
  %v352 = vmul.f32 %v258, %v351
  %v353 = vadd.f32 %v348, %v352
  %v354 = vsub.f32 %v353, %v335
  %v355 = vand.u32 2147483647, %v354
  %vm356 = vcmp.lt.f32.partialorder %v355, 1.0
  %v357 = vmul.f32 %v354, 0.5
  %v358 = vmul.f32 %v357, %v354
  %v359 = vsub.f32 %v355, 0.5
  %v360 = vsel %vm356, %v358, %v359
  %v361 = vsel %vm268, %v360, 0.0
  %v362 = vrot.slane %v361, 4
  %v363 = vadd.f32 %v361, %v362
  %v364 = vrot.slane %v363, 2
  %v365 = vadd.f32 %v363, %v364
  %v366 = vrot.slane %v365, 1
  %v367 = vadd.f32 %v365, %v366
  %v368 = vsel %vm212, %v367, 0.0
  %369 = vadd.xlane.f32.xlu0 %v368
  %v370 = vpop.xlane.xlu0 %369
  %v371 = vrot.slane %v370, 4
  %v372 = vadd.f32 %v370, %v371
  %v373 = vrot.slane %v372, 2
  %v374 = vadd.f32 %v372, %v373
  %v375 = vrot.slane %v374, 1
  %v376 = vadd.f32 %v374, %v375
  %s377 = vtos %v376
  %v378 = vstv %s377
  %v379 = vmul.f32 %v378, 0.0625
  %v380 = vlaneseq
  %v381 = vand.u32 %v380, 127
  %vm382 = vcmp.eq.s32.totalorder %v381, 0
  %v383 = vsel %vm382, %v224, 0.0
  %vm384 = vcmp.eq.s32.totalorder %v381, 1
  %v385 = vsel %vm384, %v287, %v383
  %vm386 = vcmp.eq.s32.totalorder %v381, 2
  %v387 = vsel %vm386, %v333, %v385
  %vm388 = vcmp.eq.s32.totalorder %v381, 3
  %v389 = vsel %vm388, %v379, %v387
  %390 = vst [vmem:[%s3] sm:$0xff] %v389
  // Predicated region
  $region14: #{mtp_loss.1} parent=0 // pred_check
    _
  $region15: #{mtp_loss.1} parent=0 // pred_check_branch
    %392 = sbr.rel (0) target = $region17
  $region16: #{mtp_loss.1} parent=0 // pred_region
    _
  $region17: #{mtp_loss.1} parent=0 // pred_fallthru
    _
  // Predicated region
  $region18: #{mtp_loss.1} parent=0 // pred_check
    _
  $region19: #{mtp_loss.1} parent=0 // pred_check_branch
    %394 = sbr.rel (0) target = $region21
  $region20: #{mtp_loss.1} parent=0 // pred_region
    _
  $region21: #{mtp_loss.1} parent=0 // pred_fallthru
    _

</llo_original>
